<compile_context>
chip_gen: v7x
topology: tpu7x:2x2x1
jax: 0.10.0
libtpu: 0.0.40
codegen_flags: <defaults>
</compile_context>

<pallas_src>
import functools

import jax
import jax.numpy as jnp
from jax import lax
from jax.experimental import pallas as pl
from jax.experimental.pallas import tpu as pltpu


def _leaky_relu(x, slope=0.01):
    # Valid for 0 < slope < 1: picks x when x > 0, slope*x when x <= 0.
    return jnp.maximum(x, slope * x)


def local_estimator_kernel(x_ref, w1_ref, b1_ref, w2_ref, b2_ref,
                           w3_ref, b3_ref, o_ref, *, use_bf16):
    # x_ref: (tm, D).  All parameters are tiny and fully VMEM-resident.
    mxu_dtype = jnp.bfloat16 if use_bf16 else jnp.float32

    x = x_ref[...].astype(mxu_dtype)
    w1 = w1_ref[...].astype(mxu_dtype)
    w2 = w2_ref[...].astype(mxu_dtype)

    # (tm, D) x (D, 64) -> f32 accumulate.
    h = jnp.dot(x, w1, preferred_element_type=jnp.float32) + b1_ref[...]
    h = _leaky_relu(h)

    # (tm, 64) x (64, 32) -> f32 accumulate.
    h = jnp.dot(h.astype(mxu_dtype), w2,
                preferred_element_type=jnp.float32) + b2_ref[...]
    h = _leaky_relu(h)

    # 32 -> 1 head: contract (1, 32) with (tm, 32) along the feature axis.
    # Result is a lane-dense (1, tm) row -> full unmasked vector stores.
    # Kept in f32: the contraction is tiny (K=32) and off the critical path.
    o = lax.dot_general(
        w3_ref[...], h,
        dimension_numbers=(((1,), (1,)), ((), ())),
        preferred_element_type=jnp.float32)
    o_ref[...] = (o + b3_ref[...]).astype(o_ref.dtype)


def default_use_bf16_mxu():
    """bf16 MXU inputs (f32 accumulation) on v6e / v7x; f32 on v5e and older."""
    try:
        kind = jax.devices()[0].device_kind.lower()
    except Exception:
        return True
    for old_gen in ("v2", "v3", "v4", "v5"):
        if old_gen in kind:
            return False
    return True


def _choose_tm(n_rows, tm_req):
    """Row-tile selection:
       - tiny inputs: one block equal to the full extent (always a legal block),
       - otherwise a multiple of 128 (lane-dense output blocks), capped both by
         the request and by ~N/2 so there are >= 2 tiles (v7x has 2 TCs)."""
    if n_rows <= 256:
        return n_rows
    tm_req = max(128, (tm_req // 128) * 128)
    half = -(-((n_rows + 1) // 2) // 128) * 128   # round_up(ceil(N/2), 128)
    return max(128, min(tm_req, half))


def local_estimator(sptm_s, params, *, tm=2048, use_bf16_mxu=None):
    """sptm_s: (N, input_size) float32 (or bfloat16).  Returns (N, 1) float32."""
    w1, b1, w2, b2, w3, b3 = params
    N, D = sptm_s.shape

    if use_bf16_mxu is None:
        use_bf16_mxu = default_use_bf16_mxu()

    tm_eff = _choose_tm(N, tm)
    n_tiles = pl.cdiv(N, tm_eff)          # ragged last block handled by Pallas

    const = lambda i: (0, 0)              # parameters: same (whole) block each step

    kernel = functools.partial(local_estimator_kernel, use_bf16=use_bf16_mxu)

    out_row = pl.pallas_call(
        kernel,
        out_shape=jax.ShapeDtypeStruct((1, N), jnp.float32),
        grid_spec=pltpu.PrefetchScalarGridSpec(
            num_scalar_prefetch=0,
            grid=(n_tiles,),
            in_specs=[
                pl.BlockSpec((tm_eff, D), lambda i: (i, 0)),   # x row tile
                pl.BlockSpec((D, 64), const),                  # W1 [in, out]
                pl.BlockSpec((1, 64), const),                  # b1
                pl.BlockSpec((64, 32), const),                 # W2 [in, out]
                pl.BlockSpec((1, 32), const),                  # b2
                pl.BlockSpec((1, 32), const),                  # W3 (torch layout [out, in])
                pl.BlockSpec((1, 1), const),                   # b3
            ],
            out_specs=pl.BlockSpec((1, tm_eff), lambda i: (0, i)),
        ),
        compiler_params=pltpu.CompilerParams(
            dimension_semantics=("parallel",)),
    )(sptm_s, w1, b1, w2, b2, w3, b3)

    # (1, N) lane-dense slab -> (N, 1) column (layout plumbing outside kernel).
    return out_row.reshape(N, 1)


def init_params(key, input_size):
    """Deterministic init mimicking torch.nn.Linear (uniform +/- 1/sqrt(fan_in))."""
    ks = jax.random.split(key, 6)

    def uni(k, shape, fan_in):
        bound = 1.0 / jnp.sqrt(jnp.float32(fan_in))
        return jax.random.uniform(k, shape, jnp.float32, -bound, bound)

    w1 = uni(ks[0], (input_size, 64), input_size)   # [in, out]
    b1 = uni(ks[1], (1, 64), input_size)
    w2 = uni(ks[2], (64, 32), 64)                   # [in, out]
    b2 = uni(ks[3], (1, 32), 64)
    w3 = uni(ks[4], (1, 32), 32)                    # torch layout [out, in]
    b3 = uni(ks[5], (1, 1), 32)
    return (w1, b1, w2, b2, w3, b3)


def reference(sptm_s, params):
    w1, b1, w2, b2, w3, b3 = params
    hp = lax.Precision.HIGHEST
    h = jnp.maximum(jnp.dot(sptm_s, w1, precision=hp) + b1, 0.01 * (jnp.dot(sptm_s, w1, precision=hp) + b1))
    h = jnp.maximum(jnp.dot(h, w2, precision=hp) + b2, 0.01 * (jnp.dot(h, w2, precision=hp) + b2))
    return jnp.dot(h, w3.T, precision=hp) + b3


if __name__ == "__main__":
    key = jax.random.PRNGKey(0)
    k_x, k_p = jax.random.split(key)

    # sptm_s is the packed spatio-temporal sequence: (batch*seq, input_size)
    batch, seq, input_size = 2, 8, 128
    N = batch * seq
    sptm_s = jax.random.normal(k_x, (N, input_size), jnp.float32)

    params = init_params(k_p, input_size)

    use_bf16 = default_use_bf16_mxu()
    out = local_estimator(sptm_s, params, use_bf16_mxu=use_bf16)
    out = jax.block_until_ready(out)

    ref = reference(sptm_s, params)
    assert out.shape == (N, 1)
    # bf16 MXU inputs (v6e/v7x default) -> relaxed tolerance; f32 path stays tight.
    tol = 5e-2 if use_bf16 else 1e-5
    assert jnp.allclose(out, ref, atol=tol, rtol=tol), "mismatch vs reference"

    print("KERNEL_OK")
</pallas_src>

<mosaic_0001>
module attributes {stable_mosaic.version = 11 : i64} {
  func.func @local_estimator_kernel(%arg0: i32, %arg1: memref<16x128xf32, #tpu.memory_space<vmem>>, %arg2: memref<128x64xf32, #tpu.memory_space<vmem>>, %arg3: memref<1x64xf32, #tpu.memory_space<vmem>>, %arg4: memref<64x32xf32, #tpu.memory_space<vmem>>, %arg5: memref<1x32xf32, #tpu.memory_space<vmem>>, %arg6: memref<1x32xf32, #tpu.memory_space<vmem>>, %arg7: memref<1x1xf32, #tpu.memory_space<vmem>>, %arg8: memref<1x16xf32, #tpu.memory_space<vmem>>) attributes {dimension_semantics = [#tpu.dimension_semantics<parallel>], iteration_bounds = array<i64: 1>, scalar_prefetch = 0 : i64, scratch_operands = 0 : i64, tpu.core_type = #tpu.core_type<tc>, window_params = [{transform_indices = @transform_0, window_bounds = array<i64: 16, 128>}, {pipeline_mode = #tpu.pipeline_mode<synchronous>, transform_indices = @transform_1, window_bounds = array<i64: 128, 64>}, {pipeline_mode = #tpu.pipeline_mode<synchronous>, transform_indices = @transform_2, window_bounds = array<i64: 1, 64>}, {pipeline_mode = #tpu.pipeline_mode<synchronous>, transform_indices = @transform_3, window_bounds = array<i64: 64, 32>}, {pipeline_mode = #tpu.pipeline_mode<synchronous>, transform_indices = @transform_4, window_bounds = array<i64: 1, 32>}, {pipeline_mode = #tpu.pipeline_mode<synchronous>, transform_indices = @transform_5, window_bounds = array<i64: 1, 32>}, {pipeline_mode = #tpu.pipeline_mode<synchronous>, transform_indices = @transform_6, window_bounds = array<i64: 1, 1>}, {transform_indices = @transform_7, window_bounds = array<i64: 1, 16>}]} {
    %c0 = arith.constant 0 : index
    %c0_0 = arith.constant 0 : index
    %0 = vector.load %arg1[%c0, %c0_0] : memref<16x128xf32, #tpu.memory_space<vmem>>, vector<16x128xf32>
    %1 = arith.truncf %0 : vector<16x128xf32> to vector<16x128xbf16>
    %c0_1 = arith.constant 0 : index
    %c0_2 = arith.constant 0 : index
    %2 = vector.load %arg2[%c0_1, %c0_2] : memref<128x64xf32, #tpu.memory_space<vmem>>, vector<128x64xf32>
    %3 = arith.truncf %2 : vector<128x64xf32> to vector<128x64xbf16>
    %c0_3 = arith.constant 0 : index
    %c0_4 = arith.constant 0 : index
    %4 = vector.load %arg4[%c0_3, %c0_4] : memref<64x32xf32, #tpu.memory_space<vmem>>, vector<64x32xf32>
    %5 = arith.truncf %4 : vector<64x32xf32> to vector<64x32xbf16>
    %cst = arith.constant dense<0.000000e+00> : vector<16x64xf32>
    %6 = tpu.matmul %1, %3, %cst {dimension_numbers = #tpu.dot_dimension_numbers<[1], [0], [0], [1], [0, 0, 1, 1], [], []>} : vector<16x128xbf16>, vector<128x64xbf16>, vector<16x64xf32> -> vector<16x64xf32>
    %c0_5 = arith.constant 0 : index
    %c0_6 = arith.constant 0 : index
    %7 = vector.load %arg3[%c0_5, %c0_6] : memref<1x64xf32, #tpu.memory_space<vmem>>, vector<1x64xf32>
    %8 = vector.broadcast %7 : vector<1x64xf32> to vector<16x64xf32>
    %9 = arith.addf %6, %8 : vector<16x64xf32>
    %cst_7 = arith.constant 0.00999999977 : f32
    %10 = vector.broadcast %cst_7 : f32 to vector<16x64xf32>
    %11 = arith.mulf %10, %9 : vector<16x64xf32>
    %12 = arith.maximumf %9, %11 : vector<16x64xf32>
    %13 = arith.truncf %12 : vector<16x64xf32> to vector<16x64xbf16>
    %cst_8 = arith.constant dense<0.000000e+00> : vector<16x32xf32>
    %14 = tpu.matmul %13, %5, %cst_8 {dimension_numbers = #tpu.dot_dimension_numbers<[1], [0], [0], [1], [0, 0, 1, 1], [], []>} : vector<16x64xbf16>, vector<64x32xbf16>, vector<16x32xf32> -> vector<16x32xf32>
    %c0_9 = arith.constant 0 : index
    %c0_10 = arith.constant 0 : index
    %15 = vector.load %arg5[%c0_9, %c0_10] : memref<1x32xf32, #tpu.memory_space<vmem>>, vector<1x32xf32>
    %16 = vector.broadcast %15 : vector<1x32xf32> to vector<16x32xf32>
    %17 = arith.addf %14, %16 : vector<16x32xf32>
    %cst_11 = arith.constant 0.00999999977 : f32
    %18 = vector.broadcast %cst_11 : f32 to vector<16x32xf32>
    %19 = arith.mulf %18, %17 : vector<16x32xf32>
    %20 = arith.maximumf %17, %19 : vector<16x32xf32>
    %c0_12 = arith.constant 0 : index
    %c0_13 = arith.constant 0 : index
    %21 = vector.load %arg6[%c0_12, %c0_13] : memref<1x32xf32, #tpu.memory_space<vmem>>, vector<1x32xf32>
    %cst_14 = arith.constant dense<0.000000e+00> : vector<1x16xf32>
    %22 = tpu.matmul %21, %20, %cst_14 {dimension_numbers = #tpu.dot_dimension_numbers<[1], [1], [0], [0], [0, 0, 1, 0], [], []>} : vector<1x32xf32>, vector<16x32xf32>, vector<1x16xf32> -> vector<1x16xf32>
    %c0_15 = arith.constant 0 : index
    %c0_16 = arith.constant 0 : index
    %23 = vector.load %arg7[%c0_15, %c0_16] : memref<1x1xf32, #tpu.memory_space<vmem>>, vector<1x1xf32>
    %24 = vector.broadcast %23 : vector<1x1xf32> to vector<1x16xf32>
    %25 = arith.addf %22, %24 : vector<1x16xf32>
    %c0_17 = arith.constant 0 : index
    %c0_18 = arith.constant 0 : index
    %26 = vector.load %arg8[%c0_17, %c0_18] : memref<1x16xf32, #tpu.memory_space<vmem>>, vector<1x16xf32>
    tpu.vector_store %arg8[%c0_17, %c0_18], %25 {strides = array<i32>} : memref<1x16xf32, #tpu.memory_space<vmem>>, vector<1x16xf32>,
    return
  }
  func.func @transform_0(%arg0: i32) -> (i32, i32) {
    %c0_i32 = arith.constant 0 : i32
    %c0_i32_0 = arith.constant 0 : i32
    return %arg0, %c0_i32 : i32, i32
  }
  func.func @transform_1(%arg0: i32) -> (i32, i32) {
    %c0_i32 = arith.constant 0 : i32
    %c0_i32_0 = arith.constant 0 : i32
    %c0_i32_1 = arith.constant 0 : i32
    return %c0_i32, %c0_i32_0 : i32, i32
  }
  func.func @transform_2(%arg0: i32) -> (i32, i32) {
    %c0_i32 = arith.constant 0 : i32
    %c0_i32_0 = arith.constant 0 : i32
    %c0_i32_1 = arith.constant 0 : i32
    return %c0_i32, %c0_i32_0 : i32, i32
  }
  func.func @transform_3(%arg0: i32) -> (i32, i32) {
    %c0_i32 = arith.constant 0 : i32
    %c0_i32_0 = arith.constant 0 : i32
    %c0_i32_1 = arith.constant 0 : i32
    return %c0_i32, %c0_i32_0 : i32, i32
  }
  func.func @transform_4(%arg0: i32) -> (i32, i32) {
    %c0_i32 = arith.constant 0 : i32
    %c0_i32_0 = arith.constant 0 : i32
    %c0_i32_1 = arith.constant 0 : i32
    return %c0_i32, %c0_i32_0 : i32, i32
  }
  func.func @transform_5(%arg0: i32) -> (i32, i32) {
    %c0_i32 = arith.constant 0 : i32
    %c0_i32_0 = arith.constant 0 : i32
    %c0_i32_1 = arith.constant 0 : i32
    return %c0_i32, %c0_i32_0 : i32, i32
  }
  func.func @transform_6(%arg0: i32) -> (i32, i32) {
    %c0_i32 = arith.constant 0 : i32
    %c0_i32_0 = arith.constant 0 : i32
    %c0_i32_1 = arith.constant 0 : i32
    return %c0_i32, %c0_i32_0 : i32, i32
  }
  func.func @transform_7(%arg0: i32) -> (i32, i32) {
    %c0_i32 = arith.constant 0 : i32
    %c0_i32_0 = arith.constant 0 : i32
    return %c0_i32, %arg0 : i32, i32
  }
}

</mosaic_0001>

<llo_original>
// kernel: tpu_custom_call.1
$region0: #{tpu_custom_call.1}
  #allocation0 [shape = 'u32[]', space=smem, size = 0x4, offset = 0x4, fixed_abs, tag = 'smem constant byte address 0x4 - core index']
  #allocation1 [shape = 'u32[144,128]{1,0:T(1,128)}', space=vmem, size = 0x12000, scoped, tag = 'internal scratch']
  #allocation2 [shape = 'f32[1,1]{1,0:T(1,128)S(1)}', space=vmem, size = 0x200, scoped, tag = 'scoped memory for tpu_custom_call.1']
  %s0 = inlined_call_operand.vmem [shape: f32[16,128], index: 0, kind: input, shape index: {}]
  %s1 = inlined_call_operand.vmem [shape: f32[128,64], index: 1, kind: input, shape index: {}]
  %s2 = inlined_call_operand.vmem [shape: f32[1,64], index: 2, kind: input, shape index: {}]
  %s3 = inlined_call_operand.vmem [shape: f32[64,32], index: 3, kind: input, shape index: {}]
  %s4 = inlined_call_operand.vmem [shape: f32[1,32], index: 4, kind: input, shape index: {}]
  %s5 = inlined_call_operand.vmem [shape: f32[1,32], index: 5, kind: input, shape index: {}]
  %s6 = inlined_call_operand.<no memory space> [shape: f32[1,1], index: 6, kind: input, shape index: {}]
  %s7 = inlined_call_operand.hbm [shape: f32[1,16], index: 7, kind: output, shape index: {}]
  %s8 = sld [smem:[#allocation0]]
  $region38: #{tpu_custom_call.1} parent=0
    _
  %s10 = ssub.s32 1, %s8
  %s11 = scalar_select 0, %s10, %s8
  %v12 = vstv %s6
  %13 = vst [vmem:[#allocation2] sm:$0x1] %v12
  $region1: #{tpu_custom_call.1} parent=0
    #allocation3 [shape = 'u8[512]{0}', space=vmem, size = 0x400, scoped, tag = 'output window, operand 0, single buffered']
    #allocation4 [shape = 's32[1]{0}', space=sflag, size = 0x4, scoped, tag = 'scoped memory for tpu_custom_call.1']
    %14 = vsyncpa [#allocation4], 0
    // Predicated region
    $region2: #{tpu_custom_call.1} parent=1 // pred_check
      _
    $region3: #{tpu_custom_call.1} parent=1 // pred_check_branch
      %16 = sbr.rel (0) target = $region5
    $region4: #{tpu_custom_call.1} parent=1 // pred_region
      _
    $region5: #{tpu_custom_call.1} parent=1 // pred_fallthru
      _
    // Predicated region
    $region6: #{tpu_custom_call.1} parent=1 // pred_check
      _
    $region7: #{tpu_custom_call.1} parent=1 // pred_check_branch
      %18 = sbr.rel (0) target = $region9
    $region8: #{tpu_custom_call.1} parent=1 // pred_region
      _
    $region9: #{tpu_custom_call.1} parent=1 // pred_fallthru
      _
    // Predicated region
    $region10: #{tpu_custom_call.1} parent=1 // pred_check
      _
    $region11: #{tpu_custom_call.1} parent=1 // pred_check_branch
      %20 = sbr.rel (0) target = $region13
    $region12: #{tpu_custom_call.1} parent=1 // pred_region
      _
    $region13: #{tpu_custom_call.1} parent=1 // pred_fallthru
      _
    // Predicated region
    $region14: #{tpu_custom_call.1} parent=1 // pred_check
      _
    $region15: #{tpu_custom_call.1} parent=1 // pred_check_branch
      %22 = sbr.rel (0) target = $region17
    $region16: #{tpu_custom_call.1} parent=1 // pred_region
      _
    $region17: #{tpu_custom_call.1} parent=1 // pred_fallthru
      _
    // Predicated region
    $region18: #{tpu_custom_call.1} parent=1 // pred_check
      _
    $region19: #{tpu_custom_call.1} parent=1 // pred_check_branch
      %24 = sbr.rel (0) target = $region21
    $region20: #{tpu_custom_call.1} parent=1 // pred_region
      _
    $region21: #{tpu_custom_call.1} parent=1 // pred_fallthru
      _
    // Predicated region
    $region22: #{tpu_custom_call.1} parent=1 // pred_check
      _
    $region23: #{tpu_custom_call.1} parent=1 // pred_check_branch
      %26 = sbr.rel (0) target = $region25
    $region24: #{tpu_custom_call.1} parent=1 // pred_region
      _
    $region25: #{tpu_custom_call.1} parent=1 // pred_fallthru
      _
    // Predicated region
    $region26: #{tpu_custom_call.1} parent=1 // pred_check
      _
    $region27: #{tpu_custom_call.1} parent=1 // pred_check_branch
      %28 = sbr.rel (0) target = $region29
    $region28: #{tpu_custom_call.1} parent=1 // pred_region
      _
    $region29: #{tpu_custom_call.1} parent=1 // pred_fallthru
      _
    %v30 = vld [vmem:[%s0] sm:$0xff]
    %v31 = vld [vmem:[%s0 + $0x8] sm:$0xff]
    %v32 = vpack.c.bf16 %v31, %v30
    %v33 = vld [vmem:[%s1] sm:$0xff]
    %v34 = vld [vmem:[%s1 + $0x8] sm:$0xff]
    %v35 = vld [vmem:[%s1 + $0x10] sm:$0xff]
    %v36 = vld [vmem:[%s1 + $0x18] sm:$0xff]
    %v37 = vld [vmem:[%s1 + $0x20] sm:$0xff]
    %v38 = vld [vmem:[%s1 + $0x28] sm:$0xff]
    %v39 = vld [vmem:[%s1 + $0x30] sm:$0xff]
    %v40 = vld [vmem:[%s1 + $0x38] sm:$0xff]
    %v41 = vld [vmem:[%s1 + $0x40] sm:$0xff]
    %v42 = vld [vmem:[%s1 + $0x48] sm:$0xff]
    %v43 = vld [vmem:[%s1 + $0x50] sm:$0xff]
    %v44 = vld [vmem:[%s1 + $0x58] sm:$0xff]
    %v45 = vld [vmem:[%s1 + $0x60] sm:$0xff]
    %v46 = vld [vmem:[%s1 + $0x68] sm:$0xff]
    %v47 = vld [vmem:[%s1 + $0x70] sm:$0xff]
    %v48 = vld [vmem:[%s1 + $0x78] sm:$0xff]
    %v49 = vpack.c.bf16 %v34, %v33
    %v50 = vpack.c.bf16 %v36, %v35
    %v51 = vpack.c.bf16 %v38, %v37
    %v52 = vpack.c.bf16 %v40, %v39
    %v53 = vpack.c.bf16 %v42, %v41
    %v54 = vpack.c.bf16 %v44, %v43
    %v55 = vpack.c.bf16 %v46, %v45
    %v56 = vpack.c.bf16 %v48, %v47
    %v57 = vld [vmem:[%s3] sm:$0xff]
    %v58 = vld [vmem:[%s3 + $0x8] sm:$0xff]
    %v59 = vld [vmem:[%s3 + $0x10] sm:$0xff]
    %v60 = vld [vmem:[%s3 + $0x18] sm:$0xff]
    %v61 = vld [vmem:[%s3 + $0x20] sm:$0xff]
    %v62 = vld [vmem:[%s3 + $0x28] sm:$0xff]
    %v63 = vld [vmem:[%s3 + $0x30] sm:$0xff]
    %v64 = vld [vmem:[%s3 + $0x38] sm:$0xff]
    %v65 = vpack.c.bf16 %v58, %v57
    %v66 = vpack.c.bf16 %v60, %v59
    %v67 = vpack.c.bf16 %v62, %v61
    %v68 = vpack.c.bf16 %v64, %v63
    %v69 = vld [vmem:[%s2] sm:$0x1]
    %v71 = vlaneseq
    %v72 = vshrl.u32 %v71, 7
    %v73 = vsub.s32 0, %v72
    %v74 = vrot.slane %v69, %v73
    %76 = vmatprep.subr.bf16.mxu0 0
    %77 = vmatpush1.bf16.msra.mxu0 %v49
    %78 = vmatprep.subr.bf16.mxu0 0
    %79 = vmatpush1.bf16.msra.mxu0 %v50
    %80 = vmatprep.subr.bf16.mxu0 0
    %81 = vmatpush1.bf16.msra.mxu0 %v51
    %82 = vmatprep.subr.bf16.mxu0 0
    %83 = vmatpush1.bf16.msra.mxu0 %v52
    %84 = vmatprep.subr.bf16.mxu0 0
    %85 = vmatpush1.bf16.msra.mxu0 %v53
    %86 = vmatprep.subr.bf16.mxu0 0
    %87 = vmatpush1.bf16.msra.mxu0 %v54
    %88 = vmatprep.subr.bf16.mxu0 0
    %89 = vmatpush1.bf16.msra.mxu0 %v55
    %90 = vmatprep.subr.bf16.mxu0 0
    %91 = vmatpush1.bf16.msra.mxu0 %v56
    %92 = vmatprep.subr.bf16.mxu0 0
    %93 = vmatpush1.bf16.msra.mxu0 0
    %94 = vmatprep.subr.bf16.mxu0 0
    %95 = vmatpush1.bf16.msra.mxu0 0
    %96 = vmatprep.subr.bf16.mxu0 0
    %97 = vmatpush1.bf16.msra.mxu0 0
    %98 = vmatprep.subr.bf16.mxu0 0
    %99 = vmatpush1.bf16.msra.mxu0 0
    %100 = vmatprep.subr.bf16.mxu0 0
    %101 = vmatpush1.bf16.msra.mxu0 0
    %102 = vmatprep.subr.bf16.mxu0 0
    %103 = vmatpush1.bf16.msra.mxu0 0
    %104 = vmatprep.subr.bf16.mxu0 0
    %105 = vmatpush1.bf16.msra.mxu0 0
    %106 = vmatprep.subr.bf16.mxu0 0
    %107 = vmatpush1.bf16.msra.mxu0 0
    %108 = vmatprep.mubr.bf16.mxu0 0
    %109 = vmatmul.mubr.bf16.gmra.mrb[0].mxu0 %v32
    %v110 = vpop.f32.mrb[0].mxu0
    %v111 = vadd.f32 %v74, %v110
    %v112 = vpop.f32.mrb[0].mxu0
    %v113 = vpop.f32.mrb[0].mxu0
    %v114 = vadd.f32 %v74, %v113
    %v115 = vpop.f32.mrb[0].mxu0
    %116 = vdwg.mxu0
    %v117 = vmul.f32 %v111, 0.01
    %v118 = vmul.f32 %v114, 0.01
    %v119 = vmax.f32 %v111, %v117
    %v120 = vmax.f32 %v114, %v118
    %v121 = vpack.c.bf16 %v120, %v119
    %v122 = vld [vmem:[%s4] sm:$0x1]
    %v124 = vlaneseq
    %v125 = vshrl.u32 %v124, 7
    %v126 = vsub.s32 0, %v125
    %v127 = vrot.slane %v122, %v126
    %vm129 = vcmask 523264
    %v131 = vsel %vm129, %v121, 0
    %133 = vmatprep.subr.bf16.mxu0 0
    %134 = vmatpush1.bf16.msra.mxu0 %v65
    %135 = vmatprep.subr.bf16.mxu0 0
    %136 = vmatpush1.bf16.msra.mxu0 %v66
    %137 = vmatprep.subr.bf16.mxu0 0
    %138 = vmatpush1.bf16.msra.mxu0 %v67
    %139 = vmatprep.subr.bf16.mxu0 0
    %140 = vmatpush1.bf16.msra.mxu0 %v68
    %141 = vmatprep.subr.bf16.mxu0 0
    %142 = vmatpush1.bf16.msra.mxu0 0
    %143 = vmatprep.subr.bf16.mxu0 0
    %144 = vmatpush1.bf16.msra.mxu0 0
    %145 = vmatprep.subr.bf16.mxu0 0
    %146 = vmatpush1.bf16.msra.mxu0 0
    %147 = vmatprep.subr.bf16.mxu0 0
    %148 = vmatpush1.bf16.msra.mxu0 0
    %149 = vmatprep.subr.bf16.mxu0 0
    %150 = vmatpush1.bf16.msra.mxu0 0
    %151 = vmatprep.subr.bf16.mxu0 0
    %152 = vmatpush1.bf16.msra.mxu0 0
    %153 = vmatprep.subr.bf16.mxu0 0
    %154 = vmatpush1.bf16.msra.mxu0 0
    %155 = vmatprep.subr.bf16.mxu0 0
    %156 = vmatpush1.bf16.msra.mxu0 0
    %157 = vmatprep.subr.bf16.mxu0 0
    %158 = vmatpush1.bf16.msra.mxu0 0
    %159 = vmatprep.subr.bf16.mxu0 0
    %160 = vmatpush1.bf16.msra.mxu0 0
    %161 = vmatprep.subr.bf16.mxu0 0
    %162 = vmatpush1.bf16.msra.mxu0 0
    %163 = vmatprep.subr.bf16.mxu0 0
    %164 = vmatpush1.bf16.msra.mxu0 0
    %165 = vmatprep.mubr.bf16.mxu0 0
    %166 = vmatmul.mubr.bf16.gmra.mrb[0].mxu0 %v131
    %v167 = vpop.f32.mrb[0].mxu0
    %v168 = vadd.f32 %v127, %v167
    %v169 = vpop.f32.mrb[0].mxu0
    %v170 = vpop.f32.mrb[0].mxu0
    %v171 = vadd.f32 %v127, %v170
    %v172 = vpop.f32.mrb[0].mxu0
    %173 = vdwg.mxu0
    %v174 = vmul.f32 %v168, 0.01
    %v175 = vmul.f32 %v171, 0.01
    %v176 = vmax.f32 %v168, %v174
    %v177 = vmax.f32 %v171, %v175
    %v178 = vld [vmem:[%s5] sm:$0x1]
    %v179 = vld [vmem:[#allocation2] sm:$0x1]
    %181 = vset.pattern.permute.xlu0 0
    %182 = vperm.xlu0 %181, %v179
    %v183 = vpop.permute.xlu0 %182
    %v185 = vlaneseq
    %v186 = vshrl.u32 %v185, 7
    %v187 = vsub.s32 0, %v186
    %v188 = vrot.slane %v183, %v187
    %vm189 = vcmask 261120
    %v191 = vsel %vm189, %v178, 0
    %v194 = vsel %vm189, %v176, 0
    %v197 = vsel %vm189, %v177, 0
    %199 = vmatprep.subr.mxu0 0.0
    %200 = vmatpush1.xpose.msra.mxu0 %v194
    %201 = vmatprep.subr.mxu0 0.0
    %202 = vmatpush1.xpose.msra.mxu0 %v197
    %203 = vmatprep.subr.mxu0 0.0
    %204 = vmatpush1.xpose.msra.mxu0 0.0
    %205 = vmatprep.subr.mxu0 0.0
    %206 = vmatpush1.xpose.msra.mxu0 0.0
    %207 = vmatprep.subr.mxu0 0.0
    %208 = vmatpush1.xpose.msra.mxu0 0.0
    %209 = vmatprep.subr.mxu0 0.0
    %210 = vmatpush1.xpose.msra.mxu0 0.0
    %211 = vmatprep.subr.mxu0 0.0
    %212 = vmatpush1.xpose.msra.mxu0 0.0
    %213 = vmatprep.subr.mxu0 0.0
    %214 = vmatpush1.xpose.msra.mxu0 0.0
    %215 = vmatprep.subr.mxu0 0.0
    %216 = vmatpush1.xpose.msra.mxu0 0.0
    %217 = vmatprep.subr.mxu0 0.0
    %218 = vmatpush1.xpose.msra.mxu0 0.0
    %219 = vmatprep.subr.mxu0 0.0
    %220 = vmatpush1.xpose.msra.mxu0 0.0
    %221 = vmatprep.subr.mxu0 0.0
    %222 = vmatpush1.xpose.msra.mxu0 0.0
    %223 = vmatprep.subr.mxu0 0.0
    %224 = vmatpush1.xpose.msra.mxu0 0.0
    %225 = vmatprep.subr.mxu0 0.0
    %226 = vmatpush1.xpose.msra.mxu0 0.0
    %227 = vmatprep.subr.mxu0 0.0
    %228 = vmatpush1.xpose.msra.mxu0 0.0
    %229 = vmatprep.subr.mxu0 0.0
    %230 = vmatpush1.xpose.msra.mxu0 0.0
    %231 = vmatprep.subr.mxu0 0.0
    %232 = vmatpush1.xpose.msra.mxu0 0.0
    %233 = vmatprep.subr.mxu0 0.0
    %234 = vmatpush1.xpose.msra.mxu0 0.0
    %235 = vmatprep.subr.mxu0 0.0
    %236 = vmatpush1.xpose.msra.mxu0 0.0
    %237 = vmatprep.subr.mxu0 0.0
    %238 = vmatpush1.xpose.msra.mxu0 0.0
    %239 = vmatprep.subr.mxu0 0.0
    %240 = vmatpush1.xpose.msra.mxu0 0.0
    %241 = vmatprep.subr.mxu0 0.0
    %242 = vmatpush1.xpose.msra.mxu0 0.0
    %243 = vmatprep.subr.mxu0 0.0
    %244 = vmatpush1.xpose.msra.mxu0 0.0
    %245 = vmatprep.subr.mxu0 0.0
    %246 = vmatpush1.xpose.msra.mxu0 0.0
    %247 = vmatprep.subr.mxu0 0.0
    %248 = vmatpush1.xpose.msra.mxu0 0.0
    %249 = vmatprep.subr.mxu0 0.0
    %250 = vmatpush1.xpose.msra.mxu0 0.0
    %251 = vmatprep.subr.mxu0 0.0
    %252 = vmatpush1.xpose.msra.mxu0 0.0
    %253 = vmatprep.subr.mxu0 0.0
    %254 = vmatpush1.xpose.msra.mxu0 0.0
    %255 = vmatprep.subr.mxu0 0.0
    %256 = vmatpush1.xpose.msra.mxu0 0.0
    %257 = vmatprep.subr.mxu0 0.0
    %258 = vmatpush1.xpose.msra.mxu0 0.0
    %259 = vmatprep.subr.mxu0 0.0
    %260 = vmatpush1.xpose.msra.mxu0 0.0
    %261 = vmatprep.subr.mxu0 0.0
    %262 = vmatpush1.xpose.msra.mxu0 0.0
    %263 = vmatprep.mubr.f32.mxu0 0.0
    %264 = vmatmul.mubr.f32.gmra.mrb[0].mxu0 %v191
    %v265 = vpop.f32.mrb[0].mxu0
    %v266 = vadd.f32 %v188, %v265
    %v267 = vpop.f32.mrb[0].mxu0
    %268 = vdwg.mxu0
    %vm269 = vcmask 122880
    %270 = vst.msk [vmem:[#allocation3] sm:$0x1] %vm269, %v266
    // Predicated region
    $region30: #{tpu_custom_call.1} parent=1 // pred_check
      _
    $region31: #{tpu_custom_call.1} parent=1 // pred_check_branch
      %272 = sbr.rel (0) target = $region33
    $region32: #{tpu_custom_call.1} parent=1 // pred_region
      %s274 = ssub.s32 16, 16
      %275 = vsyncadd [#allocation4], %s274
      %s277 = sshll.u32 [#allocation3], 4
      %s278 = int_to_ptr.vmem [resolvable:$true] %s277
      %280 = dma.vmem_to_hbm [thread:$0]  %s278, 16, %s7, [#allocation4]
    $region33: #{tpu_custom_call.1} parent=1 // pred_fallthru
      _
    // Predicated region
    $region34: #{tpu_custom_call.1} parent=1 // pred_check
      _
    $region35: #{tpu_custom_call.1} parent=1 // pred_check_branch
      %282 = sbr.rel (0) target = $region37
    $region36: #{tpu_custom_call.1} parent=1 // pred_region
      %283 = dma.done [#allocation4], 16
    $region37: #{tpu_custom_call.1} parent=1 // pred_fallthru
      _
    %284 = vsyncpa [#allocation4], 1

</llo_original>
